<compile_context>
chip_gen: v5e
topology: v5e:2x2
jax: 0.10.0
libtpu: 0.0.40
codegen_flags: <defaults>
</compile_context>

<pallas_src>
import functools

import jax
import jax.numpy as jnp
from jax.experimental import pallas as pl
from jax.experimental.pallas import tpu as pltpu


def _round_up(a, b):
    return (a + b - 1) // b * b


@functools.lru_cache(maxsize=None)
def _tpu_generation_and_vmem():
    """Best-effort detection of TPU generation + physical VMEM bytes per core."""
    kind = ""
    try:
        dev = jax.devices()[0]
        if dev.platform == "tpu":
            kind = dev.device_kind.lower()
    except Exception:
        pass
    if "v7" in kind or "7x" in kind:
        gen = "v7x"
    elif "v6" in kind:
        gen = "v6e"
    elif "v5" in kind and ("lite" in kind or "v5e" in kind):
        gen = "v5e"
    elif "v5" in kind:
        gen = "v5p"
    elif "v4" in kind:
        gen = "v4"
    else:
        gen = "unknown"

    vmem_cap = None
    try:
        vmem_cap = int(pltpu.get_tpu_info().vmem_capacity_bytes)
    except Exception:
        vmem_cap = None
    if not vmem_cap or vmem_cap <= 0:
        vmem_cap = {
            "v7x": 64 << 20,
            "v6e": 128 << 20,
            "v5e": 128 << 20,
            "v5p": 128 << 20,
            "v4": 128 << 20,
        }.get(gen, 64 << 20)  # unknown -> conservative 64 MiB
    return gen, vmem_cap


def _mlp_kernel_acc_scratch(x_ref, w1_ref, b1_ref, w2_ref, b2_ref, o_ref, acc_ref):
    # Used when the output dtype is not f32 (e.g. bf16): keep an f32 accumulator
    # scratch resident across the hidden (reduction) axis and cast once at the end.
    k = pl.program_id(1)

    @pl.when(k == 0)
    def _():
        acc_ref[...] = jnp.zeros_like(acc_ref)

    h = jnp.dot(x_ref[...], w1_ref[...], preferred_element_type=jnp.float32)
    h = jnp.maximum(h + b1_ref[...].astype(jnp.float32), 0.0)  # ReLU
    # Dropout(p=0.0) == identity.
    # TODO(synk): for drop > 0.0 in training mode, mask with pltpu.prng_random_bits.

    acc_ref[...] += jnp.dot(h.astype(w2_ref.dtype), w2_ref[...],
                            preferred_element_type=jnp.float32)

    @pl.when(k == pl.num_programs(1) - 1)
    def _():
        o_ref[...] = (acc_ref[...] + b2_ref[...].astype(jnp.float32)).astype(o_ref.dtype)


def _mlp_kernel_acc_in_out(x_ref, w1_ref, b1_ref, w2_ref, b2_ref, o_ref):
    # Used when the output dtype is f32: accumulate directly into the resident
    # output block (saves tm*Dout*4 bytes of scratch and the final copy).
    k = pl.program_id(1)

    @pl.when(k == 0)
    def _():
        o_ref[...] = jnp.zeros_like(o_ref)

    h = jnp.dot(x_ref[...], w1_ref[...], preferred_element_type=jnp.float32)
    h = jnp.maximum(h + b1_ref[...].astype(jnp.float32), 0.0)  # ReLU
    # Dropout(p=0.0) == identity.

    o_ref[...] += jnp.dot(h.astype(w2_ref.dtype), w2_ref[...],
                          preferred_element_type=jnp.float32)

    @pl.when(k == pl.num_programs(1) - 1)
    def _():
        o_ref[...] += b2_ref[...].astype(jnp.float32)


@functools.partial(jax.jit, static_argnames=("tm", "tk"))
def mlp_pallas(x, w1, b1, w2, b2, *, tm=None, tk=None):
    """x: [M, Din]; w1: [Din, Dh]; b1: [Dh]; w2: [Dh, Dout]; b2: [Dout]."""
    M, Din = x.shape
    Dh = w1.shape[1]
    Dout = w2.shape[1]

    gen, vmem_cap = _tpu_generation_and_vmem()
    mxu_align = 256 if gen in ("v6e", "v7x") else 128   # MXU tile edge
    tk_align = 256 if gen in ("v6e", "v7x") else 128

    out_dtype = x.dtype
    use_acc_scratch = out_dtype != jnp.float32

    isz_x = jnp.dtype(x.dtype).itemsize
    isz_w1 = jnp.dtype(w1.dtype).itemsize
    isz_w2 = jnp.dtype(w2.dtype).itemsize
    isz_b1 = jnp.dtype(b1.dtype).itemsize
    isz_b2 = jnp.dtype(b2.dtype).itemsize
    isz_o = jnp.dtype(out_dtype).itemsize

    # --- token tile: weights are re-streamed once per token tile, so bigger tm
    #     raises arithmetic intensity. v6e has 128 MiB VMEM -> default 1024;
    #     v7x/v5e keep 512.
    sub = 16 if x.dtype == jnp.bfloat16 else 8
    if tm is None:
        tm_default = 1024 if gen == "v6e" else 512
        tm = min(tm_default, _round_up(M, sub))
    tm = max(sub, _round_up(tm, sub))
    if M >= 128 and tm >= 128:
        tm = _round_up(tm, mxu_align)   # align to MXU tile; padded rows are cheap

    # --- hidden chunk: bounds the fc1 intermediate and weight slabs in VMEM.
    if tk is None:
        tk = Dh if Dh <= 512 else 512
    if tk < Dh:
        tk = _round_up(tk, tk_align)
    if tk >= Dh:
        tk = Dh

    def vmem_est(tm_, tk_):
        # Every input/output block is double-buffered; plus the fc1 intermediate
        # (f32 result + cast copy) and, for non-f32 outputs, the f32 accumulator.
        est = 2 * (tm_ * Din * isz_x
                   + Din * tk_ * isz_w1
                   + tk_ * isz_b1
                   + tk_ * Dout * isz_w2
                   + Dout * isz_b2
                   + tm_ * Dout * isz_o)
        est += tm_ * tk_ * (4 + isz_w2)          # fc1 f32 slab + cast copy
        if use_acc_scratch:
            est += tm_ * Dout * 4                # f32 accumulator scratch
        return est

    # Physical-VMEM budget with headroom (e.g. ~52 MiB on v7x, ~116 MiB on v6e).
    budget = max(vmem_cap - (12 << 20), vmem_cap // 2)

    # Shrink tiles if the footprint would not fit: halve tk first, then tm.
    for _ in range(16):
        if vmem_est(tm, tk) <= budget:
            break
        if tk > tk_align:
            tk = max(tk_align, _round_up(tk // 2, tk_align))
            if tk >= Dh:
                tk = Dh
        elif tm > max(sub, 128):
            tm = max(sub, _round_up(tm // 2, sub))
        else:
            break

    # v7x has 2 TensorCores sharing the "parallel" token axis: make sure there
    # are at least 2 token tiles so neither core idles.
    if gen in ("v7x", "unknown") and tm >= 2 * sub:
        if _round_up(M, tm) // tm < 2:
            half = max(sub, _round_up(tm // 2, sub))
            if half < M:
                tm = half

    M_pad = _round_up(M, tm)
    Dh_pad = _round_up(Dh, tk) if tk < Dh else Dh

    # Zero-pad ragged dims (padded token rows are sliced off at the end; padded
    # hidden units have zero W1 cols / b1 / W2 rows -> contribute 0).
    if M_pad != M:
        x = jnp.pad(x, ((0, M_pad - M), (0, 0)))
    if Dh_pad != Dh:
        w1 = jnp.pad(w1, ((0, 0), (0, Dh_pad - Dh)))
        b1 = jnp.pad(b1, (0, Dh_pad - Dh))
        w2 = jnp.pad(w2, ((0, Dh_pad - Dh), (0, 0)))

    b1_2d = b1.reshape(1, Dh_pad)
    b2_2d = b2.reshape(1, Dout)

    grid = (M_pad // tm, Dh_pad // tk)
    n_token_tiles = grid[0]

    # Advisory cost estimate: x read once, weights re-streamed once per token
    # tile, output written once.  Per-operand itemsizes.
    flops = 2 * M_pad * Din * Dh_pad + 2 * M_pad * Dh_pad * Dout
    bytes_accessed = (isz_x * M_pad * Din
                      + n_token_tiles * (isz_w1 * Din * Dh_pad
                                         + isz_b1 * Dh_pad
                                         + isz_w2 * Dh_pad * Dout
                                         + isz_b2 * Dout)
                      + isz_o * M_pad * Dout)

    est = vmem_est(tm, tk)
    vmem_limit = None
    if est > (16 << 20):                        # v5e's scoped default is 16 MiB
        vmem_limit = int(min(max(est * 5 // 4, est + (1 << 20)), budget))

    if use_acc_scratch:
        kernel = _mlp_kernel_acc_scratch
        scratch_shapes = [pltpu.VMEM((tm, Dout), jnp.float32)]
    else:
        kernel = _mlp_kernel_acc_in_out
        scratch_shapes = []

    # NOTE: if profiling shows an exposed DMA bubble at token-tile boundaries,
    # consider pipeline_mode=pl.Buffered(3) on the W1/W2 specs (VMEM permitting).
    out = pl.pallas_call(
        kernel,
        out_shape=jax.ShapeDtypeStruct((M_pad, Dout), out_dtype),
        grid_spec=pltpu.PrefetchScalarGridSpec(
            num_scalar_prefetch=0,
            grid=grid,
            in_specs=[
                pl.BlockSpec((tm, Din), lambda i, k: (i, 0)),    # x token tile
                pl.BlockSpec((Din, tk), lambda i, k: (0, k)),    # W1 hidden chunk
                pl.BlockSpec((1, tk), lambda i, k: (0, k)),      # b1 chunk
                pl.BlockSpec((tk, Dout), lambda i, k: (k, 0)),   # W2 hidden chunk
                pl.BlockSpec((1, Dout), lambda i, k: (0, 0)),    # b2
            ],
            out_specs=pl.BlockSpec((tm, Dout), lambda i, k: (i, 0)),
            scratch_shapes=scratch_shapes,
        ),
        compiler_params=pltpu.CompilerParams(
            dimension_semantics=("parallel", "arbitrary"),
            vmem_limit_bytes=vmem_limit,
        ),
        cost_estimate=pl.CostEstimate(
            flops=flops, transcendentals=0, bytes_accessed=bytes_accessed),
    )(x, w1, b1_2d, w2, b2_2d)

    return out[:M] if M_pad != M else out


def mlp_reference(x, w1, b1, w2, b2):
    hp = jax.lax.Precision.HIGHEST
    h = jnp.maximum(jnp.dot(x, w1, precision=hp) + b1, 0.0)
    return jnp.dot(h, w2, precision=hp) + b2


if __name__ == "__main__":
    # --- Small demo at shapes implied by the module: Mlp(in_features=32) ->
    #     hidden_features = in_features // 4 = 8, out_features = in_features = 32.
    batch, seq, in_features = 2, 8, 32
    hidden_features = in_features // 4
    out_features = in_features

    key = jax.random.PRNGKey(0)
    kx, k1, k2, k3, k4 = jax.random.split(key, 5)

    x = jax.random.normal(kx, (batch, seq, in_features), dtype=jnp.float32)

    bound1 = 1.0 / (in_features ** 0.5)
    w1 = jax.random.uniform(k1, (in_features, hidden_features),
                            minval=-bound1, maxval=bound1, dtype=jnp.float32)
    b1 = jax.random.uniform(k2, (hidden_features,),
                            minval=-bound1, maxval=bound1, dtype=jnp.float32)
    bound2 = 1.0 / (hidden_features ** 0.5)
    w2 = jax.random.uniform(k3, (hidden_features, out_features),
                            minval=-bound2, maxval=bound2, dtype=jnp.float32)
    b2 = jax.random.uniform(k4, (out_features,),
                            minval=-bound2, maxval=bound2, dtype=jnp.float32)

    x2d = x.reshape(batch * seq, in_features)   # glue reshape [B,S,Din] -> [B*S,Din]
    out = mlp_pallas(x2d, w1, b1, w2, b2).reshape(batch, seq, out_features)
    jax.block_until_ready(out)
    ref = mlp_reference(x2d, w1, b1, w2, b2).reshape(batch, seq, out_features)
    assert jnp.allclose(out, ref, atol=1e-5, rtol=1e-5), "small-shape mismatch"

    # --- Larger config exercising token tiling, hidden-dim chunking, ragged M.
    M2, Din2, Dh2, Dout2 = 1000, 256, 1024, 256
    kk = jax.random.split(jax.random.PRNGKey(1), 5)
    x2 = jax.random.normal(kk[0], (M2, Din2), dtype=jnp.float32)
    w1b = jax.random.normal(kk[1], (Din2, Dh2), dtype=jnp.float32) * 0.02
    b1b = jax.random.normal(kk[2], (Dh2,), dtype=jnp.float32) * 0.02
    w2b = jax.random.normal(kk[3], (Dh2, Dout2), dtype=jnp.float32) * 0.02
    b2b = jax.random.normal(kk[4], (Dh2 and Dout2,), dtype=jnp.float32) * 0.02

    out2 = mlp_pallas(x2, w1b, b1b, w2b, b2b, tm=256, tk=512)
    jax.block_until_ready(out2)
    ref2 = mlp_reference(x2, w1b, b1b, w2b, b2b)
    assert jnp.allclose(out2, ref2, atol=1e-3, rtol=1e-3), "large-shape mismatch"

    # --- Auto-tiled path (default tm/tk, bf16) exercising the generation-aware
    #     sizing and the scratch-accumulator kernel variant.
    x3 = x2.astype(jnp.bfloat16)
    out3 = mlp_pallas(x3, w1b.astype(jnp.bfloat16), b1b.astype(jnp.bfloat16),
                      w2b.astype(jnp.bfloat16), b2b.astype(jnp.bfloat16))
    jax.block_until_ready(out3)
    ref3 = mlp_reference(x3.astype(jnp.float32), w1b, b1b, w2b, b2b)
    assert jnp.allclose(out3.astype(jnp.float32), ref3, atol=2e-2, rtol=2e-2), \
        "bf16-shape mismatch"

    print("KERNEL_OK")
</pallas_src>

<mosaic_0001>
module attributes {stable_mosaic.version = 11 : i64} {
  func.func @_mlp_kernel_acc_in_out(%arg0: i32, %arg1: i32, %arg2: memref<8x32xf32, #tpu.memory_space<vmem>>, %arg3: memref<32x8xf32, #tpu.memory_space<vmem>>, %arg4: memref<1x8xf32, #tpu.memory_space<vmem>>, %arg5: memref<8x32xf32, #tpu.memory_space<vmem>>, %arg6: memref<1x32xf32, #tpu.memory_space<vmem>>, %arg7: memref<8x32xf32, #tpu.memory_space<vmem>>) attributes {dimension_semantics = [#tpu.dimension_semantics<parallel>, #tpu.dimension_semantics<arbitrary>], iteration_bounds = array<i64: 2, 1>, scalar_prefetch = 0 : i64, scratch_operands = 0 : i64, tpu.core_type = #tpu.core_type<tc>, window_params = [{transform_indices = @transform_0, window_bounds = array<i64: 8, 32>}, {transform_indices = @transform_1, window_bounds = array<i64: 32, 8>}, {transform_indices = @transform_2, window_bounds = array<i64: 1, 8>}, {transform_indices = @transform_3, window_bounds = array<i64: 8, 32>}, {pipeline_mode = #tpu.pipeline_mode<synchronous>, transform_indices = @transform_4, window_bounds = array<i64: 1, 32>}, {transform_indices = @transform_5, window_bounds = array<i64: 8, 32>}]} {
    %c0_i32 = arith.constant 0 : i32
    %0 = arith.cmpi eq, %arg1, %c0_i32 : i32
    %1 = arith.extui %0 : i1 to i32
    %c0_i32_0 = arith.constant 0 : i32
    %2 = arith.cmpi ne, %1, %c0_i32_0 : i32
    scf.if %2 {
      %cst_16 = arith.constant 0.000000e+00 : f32
      %19 = vector.broadcast %cst_16 : f32 to vector<8x32xf32>
      %c0_17 = arith.constant 0 : index
      %c0_18 = arith.constant 0 : index
      %20 = vector.load %arg7[%c0_17, %c0_18] : memref<8x32xf32, #tpu.memory_space<vmem>>, vector<8x32xf32>
      tpu.vector_store %arg7[%c0_17, %c0_18], %19 {strides = array<i32>} : memref<8x32xf32, #tpu.memory_space<vmem>>, vector<8x32xf32>,
    } else {
    }
    %c0 = arith.constant 0 : index
    %c0_1 = arith.constant 0 : index
    %3 = vector.load %arg2[%c0, %c0_1] : memref<8x32xf32, #tpu.memory_space<vmem>>, vector<8x32xf32>
    %c0_2 = arith.constant 0 : index
    %c0_3 = arith.constant 0 : index
    %4 = vector.load %arg3[%c0_2, %c0_3] : memref<32x8xf32, #tpu.memory_space<vmem>>, vector<32x8xf32>
    %cst = arith.constant dense<0.000000e+00> : vector<8x8xf32>
    %5 = tpu.matmul %3, %4, %cst {dimension_numbers = #tpu.dot_dimension_numbers<[1], [0], [0], [1], [0, 0, 1, 1], [], []>} : vector<8x32xf32>, vector<32x8xf32>, vector<8x8xf32> -> vector<8x8xf32>
    %c0_4 = arith.constant 0 : index
    %c0_5 = arith.constant 0 : index
    %6 = vector.load %arg4[%c0_4, %c0_5] : memref<1x8xf32, #tpu.memory_space<vmem>>, vector<1x8xf32>
    %7 = vector.broadcast %6 : vector<1x8xf32> to vector<8x8xf32>
    %8 = arith.addf %5, %7 : vector<8x8xf32>
    %cst_6 = arith.constant 0.000000e+00 : f32
    %9 = vector.broadcast %cst_6 : f32 to vector<8x8xf32>
    %10 = arith.maximumf %8, %9 : vector<8x8xf32>
    %c0_7 = arith.constant 0 : index
    %c0_8 = arith.constant 0 : index
    %11 = vector.load %arg7[%c0_7, %c0_8] : memref<8x32xf32, #tpu.memory_space<vmem>>, vector<8x32xf32>
    %c0_9 = arith.constant 0 : index
    %c0_10 = arith.constant 0 : index
    %12 = vector.load %arg5[%c0_9, %c0_10] : memref<8x32xf32, #tpu.memory_space<vmem>>, vector<8x32xf32>
    %cst_11 = arith.constant dense<0.000000e+00> : vector<8x32xf32>
    %13 = tpu.matmul %10, %12, %cst_11 {dimension_numbers = #tpu.dot_dimension_numbers<[1], [0], [0], [1], [0, 0, 1, 1], [], []>} : vector<8x8xf32>, vector<8x32xf32>, vector<8x32xf32> -> vector<8x32xf32>
    %14 = arith.addf %11, %13 : vector<8x32xf32>
    %c0_12 = arith.constant 0 : index
    %c0_13 = arith.constant 0 : index
    %15 = vector.load %arg7[%c0_12, %c0_13] : memref<8x32xf32, #tpu.memory_space<vmem>>, vector<8x32xf32>
    tpu.vector_store %arg7[%c0_12, %c0_13], %14 {strides = array<i32>} : memref<8x32xf32, #tpu.memory_space<vmem>>, vector<8x32xf32>,
    %c0_i32_14 = arith.constant 0 : i32
    %16 = arith.cmpi eq, %arg1, %c0_i32_14 : i32
    %17 = arith.extui %16 : i1 to i32
    %c0_i32_15 = arith.constant 0 : i32
    %18 = arith.cmpi ne, %17, %c0_i32_15 : i32
    scf.if %18 {
      %c0_16 = arith.constant 0 : index
      %c0_17 = arith.constant 0 : index
      %19 = vector.load %arg7[%c0_16, %c0_17] : memref<8x32xf32, #tpu.memory_space<vmem>>, vector<8x32xf32>
      %c0_18 = arith.constant 0 : index
      %c0_19 = arith.constant 0 : index
      %20 = vector.load %arg6[%c0_18, %c0_19] : memref<1x32xf32, #tpu.memory_space<vmem>>, vector<1x32xf32>
      %21 = vector.broadcast %20 : vector<1x32xf32> to vector<8x32xf32>
      %22 = arith.addf %19, %21 : vector<8x32xf32>
      %c0_20 = arith.constant 0 : index
      %c0_21 = arith.constant 0 : index
      %23 = vector.load %arg7[%c0_20, %c0_21] : memref<8x32xf32, #tpu.memory_space<vmem>>, vector<8x32xf32>
      tpu.vector_store %arg7[%c0_20, %c0_21], %22 {strides = array<i32>} : memref<8x32xf32, #tpu.memory_space<vmem>>, vector<8x32xf32>,
    } else {
    }
    return
  }
  func.func @transform_0(%arg0: i32, %arg1: i32) -> (i32, i32) {
    %c0_i32 = arith.constant 0 : i32
    %c0_i32_0 = arith.constant 0 : i32
    return %arg0, %c0_i32 : i32, i32
  }
  func.func @transform_1(%arg0: i32, %arg1: i32) -> (i32, i32) {
    %c0_i32 = arith.constant 0 : i32
    %c0_i32_0 = arith.constant 0 : i32
    return %c0_i32, %arg1 : i32, i32
  }
  func.func @transform_2(%arg0: i32, %arg1: i32) -> (i32, i32) {
    %c0_i32 = arith.constant 0 : i32
    %c0_i32_0 = arith.constant 0 : i32
    return %c0_i32, %arg1 : i32, i32
  }
  func.func @transform_3(%arg0: i32, %arg1: i32) -> (i32, i32) {
    %c0_i32 = arith.constant 0 : i32
    %c0_i32_0 = arith.constant 0 : i32
    return %arg1, %c0_i32 : i32, i32
  }
  func.func @transform_4(%arg0: i32, %arg1: i32) -> (i32, i32) {
    %c0_i32 = arith.constant 0 : i32
    %c0_i32_0 = arith.constant 0 : i32
    %c0_i32_1 = arith.constant 0 : i32
    return %c0_i32, %c0_i32_0 : i32, i32
  }
  func.func @transform_5(%arg0: i32, %arg1: i32) -> (i32, i32) {
    %c0_i32 = arith.constant 0 : i32
    %c0_i32_0 = arith.constant 0 : i32
    return %arg0, %c0_i32 : i32, i32
  }
}

</mosaic_0001>

<llo_original>
// kernel: mlp_pallas.1
$region0: #{mlp_pallas.1}
  #allocation0 [shape = 'u32[]', space=smem, size = 0x4, offset = 0x4, fixed_abs, tag = 'smem constant byte address 0x4 - core index']
  #allocation1 [shape = 'u32[72,128]{1,0:T(1,128)}', space=vmem, size = 0x9000, scoped, tag = 'internal scratch']
  %s0 = inlined_call_operand.vmem [shape: f32[16,32], index: 0, kind: input, shape index: {}]
  %s1 = inlined_call_operand.vmem [shape: f32[32,8], index: 1, kind: input, shape index: {}]
  %s2 = inlined_call_operand.vmem [shape: f32[1,8], index: 2, kind: input, shape index: {}]
  %s3 = inlined_call_operand.vmem [shape: f32[8,32], index: 3, kind: input, shape index: {}]
  %s4 = inlined_call_operand.vmem [shape: f32[1,32], index: 4, kind: input, shape index: {}]
  %s5 = inlined_call_operand.hbm [shape: f32[16,32], index: 5, kind: output, shape index: {}]
  %s6 = sld [smem:[#allocation0]]
  $region61: #{mlp_pallas.1} parent=0
    _
  %s8 = ssub.s32 1, %s6
  %s9 = scalar_select 0, %s8, %s6
  $region1: #{mlp_pallas.1} parent=0
    #allocation2 [shape = 'u8[8192]{0}', space=vmem, size = 0x2000, scoped, tag = 'output window, operand 0']
    #allocation3 [shape = 's32[2]{0}', space=sflag, size = 0x8, scoped, tag = 'scoped memory for mlp_pallas.1']
    %10 = vsyncpa [#allocation3], 0
    %s11 = scalar_lea.sflag [#allocation3], 1
    %12 = vsyncpa %s11, 0
    loop: start=0, step=1, limit=4
    $region2: #{mlp_pallas.1} parent=1 // loop_pre_header
      _
    $region3: #{mlp_pallas.1} parent=1 // loop_header
      %s14 = sphi 0, %s18
      %p15 = scmp.ge.s32.totalorder %s14, 4
      %s21 = sphi 0, %s33
      %s22 = sphi 0, %s29
      %s23 = sphi 0, %s21
      %s24 = sphi 0, %s22
      %s25 = sphi 0, %s23
      %s26 = sphi 0, %s24
      %s36 = sphi 0, %s38
      %s39 = sphi 0, %s36
      %s40 = sphi 0, %s39
      %s56 = sphi 0, %s40
      %s62 = sphi 0, %s64
      %s65 = sphi 0, %s62
      %s66 = sphi 0, %s65
      %s82 = sphi 0, %s66
      %s88 = sphi 0, %s90
      %s91 = sphi 0, %s88
      %s92 = sphi 0, %s91
      %s108 = sphi 0, %s92
      %s114 = sphi 0, %s116
      %s117 = sphi 0, %s114
      %s118 = sphi 0, %s117
      %s134 = sphi 0, %s118
      %s138 = sphi 0, %s138
      %s140 = sphi 0, %s138
      %s141 = sphi 0, %s140
      %s155 = sphi 0, %s141
      %s161 = sphi 0, %s163
      %s164 = sphi 0, %s161
      %s165 = sphi 0, %s164
      %s181 = sphi 0, %s165
    $region4: #{mlp_pallas.1} parent=1 // loop_header_branch
      %17 = sbr.rel (%p15) target = $region8
    $region5: #{mlp_pallas.1} parent=1 // loop_body
      %s19 = ssub.s32 %s14, 1
      %s20 = ssub.s32 %s14, 2
      %s27 = sadd.s32 1, %s22
      %p28 = scmp.ge.s32.totalorder %s27, 1
      %s29 = scalar_select %p28, 0, %s27
      %s30 = sadd.s32 1, %s21
      %s31 = scalar_select %p28, %s30, %s21
      %p32 = scmp.ge.s32.totalorder %s31, 2
      %s33 = scalar_select %p32, 0, %s31
      %s34 = ssub.s32 %s21, %s33
      %p35 = scmp.eq.s32.totalorder %s34, 0
      %s37 = sadd.s32 %s36, 1
      %s38 = scalar_select %p35, %s36, %s37
      %p41 = pneg %p35
      %p42 = scmp.eq.s32.totalorder %s14, 1
      %p43 = por %p41, %p42
      %p44 = scmp.ne.s32.totalorder %s36, %s39
      %p45 = scmp.eq.s32.totalorder %s14, 0
      %p46 = por %p44, %p45
      %p47 = scmp.ne.s32.totalorder %s36, %s39
      %p48 = scmp.eq.s32.totalorder %s19, 1
      %p49 = por %p47, %p48
      %p50 = scmp.ne.s32.totalorder %s39, %s40
      %p51 = scmp.eq.s32.totalorder %s19, 0
      %p52 = por %p50, %p51
      %p53 = scmp.ne.s32.totalorder %s39, %s40
      %p54 = scmp.eq.s32.totalorder %s20, 1
      %p55 = por %p53, %p54
      %p57 = scmp.ne.s32.totalorder %s40, %s56
      %p58 = scmp.eq.s32.totalorder %s20, 0
      %p59 = por %p57, %p58
      %s60 = ssub.s32 %s22, %s29
      %p61 = scmp.eq.s32.totalorder %s60, 0
      %s63 = sadd.s32 %s62, 1
      %s64 = scalar_select %p61, %s62, %s63
      %p67 = pneg %p61
      %p68 = scmp.eq.s32.totalorder %s14, 1
      %p69 = por %p67, %p68
      %p70 = scmp.ne.s32.totalorder %s62, %s65
      %p71 = scmp.eq.s32.totalorder %s14, 0
      %p72 = por %p70, %p71
      %p73 = scmp.ne.s32.totalorder %s62, %s65
      %p74 = scmp.eq.s32.totalorder %s19, 1
      %p75 = por %p73, %p74
      %p76 = scmp.ne.s32.totalorder %s65, %s66
      %p77 = scmp.eq.s32.totalorder %s19, 0
      %p78 = por %p76, %p77
      %p79 = scmp.ne.s32.totalorder %s65, %s66
      %p80 = scmp.eq.s32.totalorder %s20, 1
      %p81 = por %p79, %p80
      %p83 = scmp.ne.s32.totalorder %s66, %s82
      %p84 = scmp.eq.s32.totalorder %s20, 0
      %p85 = por %p83, %p84
      %s86 = ssub.s32 %s22, %s29
      %p87 = scmp.eq.s32.totalorder %s86, 0
      %s89 = sadd.s32 %s88, 1
      %s90 = scalar_select %p87, %s88, %s89
      %p93 = pneg %p87
      %p94 = scmp.eq.s32.totalorder %s14, 1
      %p95 = por %p93, %p94
      %p96 = scmp.ne.s32.totalorder %s88, %s91
      %p97 = scmp.eq.s32.totalorder %s14, 0
      %p98 = por %p96, %p97
      %p99 = scmp.ne.s32.totalorder %s88, %s91
      %p100 = scmp.eq.s32.totalorder %s19, 1
      %p101 = por %p99, %p100
      %p102 = scmp.ne.s32.totalorder %s91, %s92
      %p103 = scmp.eq.s32.totalorder %s19, 0
      %p104 = por %p102, %p103
      %p105 = scmp.ne.s32.totalorder %s91, %s92
      %p106 = scmp.eq.s32.totalorder %s20, 1
      %p107 = por %p105, %p106
      %p109 = scmp.ne.s32.totalorder %s92, %s108
      %p110 = scmp.eq.s32.totalorder %s20, 0
      %p111 = por %p109, %p110
      %s112 = ssub.s32 %s22, %s29
      %p113 = scmp.eq.s32.totalorder %s112, 0
      %s115 = sadd.s32 %s114, 1
      %s116 = scalar_select %p113, %s114, %s115
      %p119 = pneg %p113
      %p120 = scmp.eq.s32.totalorder %s14, 1
      %p121 = por %p119, %p120
      %p122 = scmp.ne.s32.totalorder %s114, %s117
      %p123 = scmp.eq.s32.totalorder %s14, 0
      %p124 = por %p122, %p123
      %p125 = scmp.ne.s32.totalorder %s114, %s117
      %p126 = scmp.eq.s32.totalorder %s19, 1
      %p127 = por %p125, %p126
      %p128 = scmp.ne.s32.totalorder %s117, %s118
      %p129 = scmp.eq.s32.totalorder %s19, 0
      %p130 = por %p128, %p129
      %p131 = scmp.ne.s32.totalorder %s117, %s118
      %p132 = scmp.eq.s32.totalorder %s20, 1
      %p133 = por %p131, %p132
      %p135 = scmp.ne.s32.totalorder %s118, %s134
      %p136 = scmp.eq.s32.totalorder %s20, 0
      %p137 = por %p135, %p136
      %s139 = sadd.s32 %s138, 1
      %p142 = scmp.eq.s32.totalorder %s14, 1
      %p143 = scmp.ne.s32.totalorder %s138, %s140
      %p144 = scmp.eq.s32.totalorder %s14, 0
      %p145 = por %p143, %p144
      %p146 = scmp.ne.s32.totalorder %s138, %s140
      %p147 = scmp.eq.s32.totalorder %s19, 1
      %p148 = por %p146, %p147
      %p149 = scmp.ne.s32.totalorder %s140, %s141
      %p150 = scmp.eq.s32.totalorder %s19, 0
      %p151 = por %p149, %p150
      %p152 = scmp.ne.s32.totalorder %s140, %s141
      %p153 = scmp.eq.s32.totalorder %s20, 1
      %p154 = por %p152, %p153
      %p156 = scmp.ne.s32.totalorder %s141, %s155
      %p157 = scmp.eq.s32.totalorder %s20, 0
      %p158 = por %p156, %p157
      %s159 = ssub.s32 %s21, %s33
      %p160 = scmp.eq.s32.totalorder %s159, 0
      %s162 = sadd.s32 %s161, 1
      %s163 = scalar_select %p160, %s161, %s162
      %p166 = pneg %p160
      %p167 = scmp.eq.s32.totalorder %s14, 1
      %p168 = por %p166, %p167
      %p169 = scmp.ne.s32.totalorder %s161, %s164
      %p170 = scmp.eq.s32.totalorder %s14, 0
      %p171 = por %p169, %p170
      %p172 = scmp.ne.s32.totalorder %s161, %s164
      %p173 = scmp.eq.s32.totalorder %s19, 1
      %p174 = por %p172, %p173
      %p175 = scmp.ne.s32.totalorder %s164, %s165
      %p176 = scmp.eq.s32.totalorder %s19, 0
      %p177 = por %p175, %p176
      %p178 = scmp.ne.s32.totalorder %s164, %s165
      %p179 = scmp.eq.s32.totalorder %s20, 1
      %p180 = por %p178, %p179
      %p182 = scmp.ne.s32.totalorder %s165, %s181
      %p183 = scmp.eq.s32.totalorder %s20, 0
      %p184 = por %p182, %p183
      %p185 = scmp.le.s32.totalorder 1, %s14
      %p186 = scmp.lt.s32.totalorder %s14, 3
      %p187 = pnand %p185, %p186
      %p188 = pneg %p187
      // Predicated region
      $region9: #{mlp_pallas.1} parent=5 // pred_check
        _
      $region10: #{mlp_pallas.1} parent=5 // pred_check_branch
        %190 = sbr.rel (%p187) target = $region12
      $region11: #{mlp_pallas.1} parent=5 // pred_region
        %s191 = ssub.s32 %s14, 1
        // Predicated region
        $region13: #{mlp_pallas.1} parent=11 // pred_check
          %p192 = pneg %p78
        $region14: #{mlp_pallas.1} parent=11 // pred_check_branch
          %194 = sbr.rel (%p192) target = $region16
        $region15: #{mlp_pallas.1} parent=11 // pred_region
          %p195 = scmp.lt.s32.totalorder %s24, 0
          %s196 = scalar_select %p195, %s24, 0
          %s197 = smul.addr %s196, 8
          %s198 = scalar_lea.vmem %s1, %s197
        $region16: #{mlp_pallas.1} parent=11 // pred_fallthru
          _
        // Predicated region
        $region17: #{mlp_pallas.1} parent=11 // pred_check
          %p199 = pneg %p104
        $region18: #{mlp_pallas.1} parent=11 // pred_check_branch
          %201 = sbr.rel (%p199) target = $region20
        $region19: #{mlp_pallas.1} parent=11 // pred_region
          %p202 = scmp.lt.s32.totalorder %s24, 0
          %s203 = scalar_select %p202, %s24, 0
          %s204 = scalar_lea.vmem %s2, %s203
        $region20: #{mlp_pallas.1} parent=11 // pred_fallthru
          _
        // Predicated region
        $region21: #{mlp_pallas.1} parent=11 // pred_check
          %p205 = pneg %p130
        $region22: #{mlp_pallas.1} parent=11 // pred_check_branch
          %207 = sbr.rel (%p205) target = $region24
        $region23: #{mlp_pallas.1} parent=11 // pred_region
          %p208 = scmp.lt.s32.totalorder %s24, 0
          %s209 = scalar_select %p208, %s24, 0
          %s210 = smul.addr %s209, 8
          %s211 = scalar_lea.vmem %s3, %s210
        $region24: #{mlp_pallas.1} parent=11 // pred_fallthru
          _
        // Predicated region
        $region25: #{mlp_pallas.1} parent=11 // pred_check
          %p212 = pneg %p151
        $region26: #{mlp_pallas.1} parent=11 // pred_check_branch
          %214 = sbr.rel (%p212) target = $region28
        $region27: #{mlp_pallas.1} parent=11 // pred_region
          _
        $region28: #{mlp_pallas.1} parent=11 // pred_fallthru
          _
      $region12: #{mlp_pallas.1} parent=5 // pred_fallthru
        _
      %p215 = scmp.lt.s32.totalorder %s14, 2
      // Predicated region
      $region29: #{mlp_pallas.1} parent=5 // pred_check
        %p216 = pneg %p215
      $region30: #{mlp_pallas.1} parent=5 // pred_check_branch
        %218 = sbr.rel (%p216) target = $region32
      $region31: #{mlp_pallas.1} parent=5 // pred_region
        // Predicated region
        $region33: #{mlp_pallas.1} parent=31 // pred_check
          %p219 = pneg %p46
        $region34: #{mlp_pallas.1} parent=31 // pred_check_branch
          %221 = sbr.rel (%p219) target = $region36
        $region35: #{mlp_pallas.1} parent=31 // pred_region
          %p222 = scmp.lt.s32.totalorder %s21, 1
          %s223 = scalar_select %p222, %s21, 1
          %s224 = smul.addr %s223, 8
          %s225 = scalar_lea.vmem %s0, %s224
        $region36: #{mlp_pallas.1} parent=31 // pred_fallthru
          _
      $region32: #{mlp_pallas.1} parent=5 // pred_fallthru
        _
      %p226 = scmp.le.s32.totalorder 1, %s14
      %p227 = scmp.lt.s32.totalorder %s14, 3
      %p228 = pnand %p226, %p227
      %p229 = pneg %p228
      // Predicated region
      $region37: #{mlp_pallas.1} parent=5 // pred_check
        _
      $region38: #{mlp_pallas.1} parent=5 // pred_check_branch
        %231 = sbr.rel (%p228) target = $region40
      $region39: #{mlp_pallas.1} parent=5 // pred_region
        %s232 = ssub.s32 %s14, 1
        %p233 = scmp.lt.s32.totalorder %s23, 1
        %s234 = scalar_select %p233, %s23, 1
        %s235 = smul.addr %s234, 8
        %s236 = scalar_lea.vmem %s0, %s235
        %p237 = pneg %p52
        %p238 = pneg %p49
        %p239 = scmp.lt.s32.totalorder %s24, 0
        %s240 = scalar_select %p239, %s24, 0
        %s241 = smul.addr %s240, 8
        %s242 = scalar_lea.vmem %s1, %s241
        %p243 = pneg %p78
        %p244 = pneg %p75
        %p245 = scmp.lt.s32.totalorder %s24, 0
        %s246 = scalar_select %p245, %s24, 0
        %s247 = scalar_lea.vmem %s2, %s246
        %p248 = pneg %p104
        %p249 = pneg %p101
        %p250 = scmp.lt.s32.totalorder %s24, 0
        %s251 = scalar_select %p250, %s24, 0
        %s252 = smul.addr %s251, 8
        %s253 = scalar_lea.vmem %s3, %s252
        %p254 = pneg %p130
        %p255 = pneg %p127
        %p256 = pneg %p151
        %p257 = pneg %p148
        %p258 = pneg %p177
        %p259 = pneg %p174
        %s260 = sand.u32 %s164, 1
        %s261 = scalar_lea.sflag [#allocation3], %s260
        %s262 = sand.u32 %s164, 1
        %s263 = smul.addr %s262, 8
        %s264 = scalar_lea.vmem [#allocation2], %s263
        %p265 = scmp.lt.s32.totalorder %s23, 1
        %s266 = scalar_select %p265, %s23, 1
        %s267 = smul.addr %s266, 8
        %s268 = scalar_lea.vmem %s0, %s267
        %p269 = scmp.lt.s32.totalorder %s24, 0
        %s270 = scalar_select %p269, %s24, 0
        %s271 = smul.addr %s270, 8
        %s272 = scalar_lea.vmem %s1, %s271
        %p273 = scmp.lt.s32.totalorder %s24, 0
        %s274 = scalar_select %p273, %s24, 0
        %s275 = scalar_lea.vmem %s2, %s274
        %p276 = scmp.lt.s32.totalorder %s24, 0
        %s277 = scalar_select %p276, %s24, 0
        %s278 = smul.addr %s277, 8
        %s279 = scalar_lea.vmem %s3, %s278
        %p280 = scmp.eq.s32.totalorder %s24, 0
        // Predicated region
        $region41: #{mlp_pallas.1} parent=39 // pred_check
          %p281 = pneg %p280
        $region42: #{mlp_pallas.1} parent=39 // pred_check_branch
          %283 = sbr.rel (%p281) target = $region44
        $region43: #{mlp_pallas.1} parent=39 // pred_region
          %vm284 = vcmask 261120
          %285 = vst.msk [vmem:[%s264] sm:$0xff] %vm284, 0.0
        $region44: #{mlp_pallas.1} parent=39 // pred_fallthru
          _
        %v286 = vld [vmem:[%s268] sm:$0xff]
        %v287 = vld [vmem:[%s272] sm:$0xff]
        %v288 = vld [vmem:[%s272 + $0x8] sm:$0xff]
        %v289 = vld [vmem:[%s272 + $0x10] sm:$0xff]
        %v290 = vld [vmem:[%s272 + $0x18] sm:$0xff]
        %v291 = vld [vmem:[%s275] sm:$0x1]
        %v293 = vperm.slane %v291, 0
        %vm295 = vcmask 261120
        %v297 = vsel %vm295, %v286, 0
        %299 = vmatpush.msra.mxu0 0.0
        %300 = vmatpush.msra.mxu0 0.0
        %301 = vmatpush.msra.mxu0 0.0
        %302 = vmatpush.msra.mxu0 0.0
        %303 = vmatpush.msra.mxu0 0.0
        %304 = vmatpush.msra.mxu0 0.0
        %305 = vmatpush.msra.mxu0 0.0
        %306 = vmatpush.msra.mxu0 0.0
        %307 = vmatpush.msra.mxu0 0.0
        %308 = vmatpush.msra.mxu0 0.0
        %309 = vmatpush.msra.mxu0 0.0
        %310 = vmatpush.msra.mxu0 0.0
        %311 = vmatpush.msra.mxu0 %v290
        %312 = vmatpush.msra.mxu0 %v289
        %313 = vmatpush.msra.mxu0 %v288
        %314 = vmatpush.msra.mxu0 %v287
        %315 = vmatmul.f32.gmra.mxu0 %v297
        %v316 = vpop.f32.mrf.mxu0
        %v317 = vadd.f32 %v293, %v316
        %318 = vdwg.mxu0
        %v319 = vmax.f32 %v317, 0.0
        %v320 = vld [vmem:[%s264] sm:$0xff]
        %v321 = vld [vmem:[%s279] sm:$0xff]
        %vm322 = vcmask 64512
        %v324 = vsel %vm322, %v319, 0
        %326 = vmatpush.msra.mxu0 0.0
        %327 = vmatpush.msra.mxu0 0.0
        %328 = vmatpush.msra.mxu0 0.0
        %329 = vmatpush.msra.mxu0 0.0
        %330 = vmatpush.msra.mxu0 0.0
        %331 = vmatpush.msra.mxu0 0.0
        %332 = vmatpush.msra.mxu0 0.0
        %333 = vmatpush.msra.mxu0 0.0
        %334 = vmatpush.msra.mxu0 0.0
        %335 = vmatpush.msra.mxu0 0.0
        %336 = vmatpush.msra.mxu0 0.0
        %337 = vmatpush.msra.mxu0 0.0
        %338 = vmatpush.msra.mxu0 0.0
        %339 = vmatpush.msra.mxu0 0.0
        %340 = vmatpush.msra.mxu0 0.0
        %341 = vmatpush.msra.mxu0 %v321
        %342 = vmatmul.f32.gmra.mxu0 %v324
        %v343 = vpop.f32.mrf.mxu0
        %v344 = vadd.f32 0.0, %v343
        %345 = vdwg.mxu0
        %v346 = vadd.f32 %v320, %v344
        %347 = vst.msk [vmem:[%s264] sm:$0xff] %vm295, %v346
        // Predicated region
        $region45: #{mlp_pallas.1} parent=39 // pred_check
          %p348 = pneg %p280
        $region46: #{mlp_pallas.1} parent=39 // pred_check_branch
          %350 = sbr.rel (%p348) target = $region48
        $region47: #{mlp_pallas.1} parent=39 // pred_region
          %v351 = vld [vmem:[%s264] sm:$0xff]
          %v352 = vld [vmem:[%s4] sm:$0x1]
          %v354 = vperm.slane %v352, 0
          %v356 = vadd.f32 %v351, %v354
          %357 = vst.msk [vmem:[%s264] sm:$0xff] %vm295, %v356
        $region48: #{mlp_pallas.1} parent=39 // pred_fallthru
          _
        %s358 = sand.u32 %s164, 1
        %s359 = scalar_lea.sflag [#allocation3], %s358
        %s360 = sand.u32 %s164, 1
        %s361 = smul.addr %s360, 8
        %s362 = scalar_lea.vmem [#allocation2], %s361
        // Predicated region
        $region49: #{mlp_pallas.1} parent=39 // pred_check
          %p363 = pneg %p174
        $region50: #{mlp_pallas.1} parent=39 // pred_check_branch
          %365 = sbr.rel (%p363) target = $region52
        $region51: #{mlp_pallas.1} parent=39 // pred_region
          %367 = vsyncadd %s359, 0
          %s368 = smul.addr %s23, 8
          %s369 = scalar_lea.hbm %s5, %s368
          %s371 = sshll.u32 %s362, 4
          %s372 = int_to_ptr.vmem [resolvable:$true] %s371
          %s373 = sshll.u32 %s369, 4
          %s374 = int_to_ptr.hbm [resolvable:$true] %s373
          %376 = dma.vmem_to_hbm [thread:$0]  %s372, 128, %s374, %s359
        $region52: #{mlp_pallas.1} parent=39 // pred_fallthru
          _
      $region40: #{mlp_pallas.1} parent=5 // pred_fallthru
        _
      %p377 = scmp.le.s32.totalorder 2, %s14
      // Predicated region
      $region53: #{mlp_pallas.1} parent=5 // pred_check
        %p378 = pneg %p377
      $region54: #{mlp_pallas.1} parent=5 // pred_check_branch
        %380 = sbr.rel (%p378) target = $region56
      $region55: #{mlp_pallas.1} parent=5 // pred_region
        %s381 = ssub.s32 %s14, 2
        // Predicated region
        $region57: #{mlp_pallas.1} parent=55 // pred_check
          %p382 = pneg %p180
        $region58: #{mlp_pallas.1} parent=55 // pred_check_branch
          %384 = sbr.rel (%p382) target = $region60
        $region59: #{mlp_pallas.1} parent=55 // pred_region
          %s385 = sand.u32 %s165, 1
          %s386 = scalar_lea.sflag [#allocation3], %s385
          %s387 = sand.u32 %s165, 1
          %s388 = smul.addr %s387, 8
          %s389 = scalar_lea.vmem [#allocation2], %s388
          %391 = dma.done %s386, 128
        $region60: #{mlp_pallas.1} parent=55 // pred_fallthru
          _
      $region56: #{mlp_pallas.1} parent=5 // pred_fallthru
        _
    $region6: #{mlp_pallas.1} parent=1 // loop_footer
      %s18 = sadd.s32 1, %s14
    $region7: #{mlp_pallas.1} parent=1 // loop_footer_branch
      %13 = sbr.rel target = $region3
    $region8: #{mlp_pallas.1} parent=1 // loop_exit
      _
    %392 = vsyncpa [#allocation3], 1
    %s393 = scalar_lea.sflag [#allocation3], 1
    %394 = vsyncpa %s393, 1

</llo_original>
